<compile_context>
chip_gen: v7x
topology: tpu7x:2x2x1
jax: 0.10.0
libtpu: 0.0.40
codegen_flags: <defaults>
</compile_context>

<pallas_src>
import jax
import jax.numpy as jnp
from jax.experimental import pallas as pl
from jax.experimental.pallas import tpu as pltpu


def _conv1x1_relu_kernel(wr_ref, wi_ref, xr_ref, xi_ref, o_ref):
    # 1x1 conv over channels == channel matmul on the MXU; ReLU fused on VPU.
    acc = jnp.dot(wr_ref[...], xr_ref[...], preferred_element_type=jnp.float32)
    acc = acc + jnp.dot(wi_ref[...], xi_ref[...],
                        preferred_element_type=jnp.float32)
    o_ref[...] = jnp.maximum(acc, 0.0).astype(o_ref.dtype)


def conv1x1_relu(w_r, w_i, x_r, x_i, *, lane_tile=1024):
    """w_r, w_i: (Co2, Ci). x_r, x_i: (B, Ci, N).
    Returns relu(w_r @ x_r + w_i @ x_i) with shape (B, Co2, N)."""
    assert lane_tile % 128 == 0
    co2, ci = w_r.shape
    b, ci_x, n = x_r.shape
    assert ci == ci_x and x_i.shape == x_r.shape and w_i.shape == w_r.shape

    if n <= lane_tile:
        # Full-N block: legal even if N is not a multiple of 128, no padding.
        tile, n_tiles = n, 1
    else:
        # Multiple-of-128 tile; cdiv grid, edge block is write-masked.
        tile, n_tiles = lane_tile, pl.cdiv(n, lane_tile)

    grid = (b, n_tiles)
    # Weights: full block, constant index_map -> VMEM-resident across the grid.
    w_spec = pl.BlockSpec((co2, ci), lambda bi, j: (0, 0))
    x_spec = pl.BlockSpec((pl.Squeezed(), ci, tile), lambda bi, j: (bi, 0, j))
    o_spec = pl.BlockSpec((pl.Squeezed(), co2, tile), lambda bi, j: (bi, 0, j))

    return pl.pallas_call(
        _conv1x1_relu_kernel,
        out_shape=jax.ShapeDtypeStruct((b, co2, n), x_r.dtype),
        grid=grid,
        in_specs=[w_spec, w_spec, x_spec, x_spec],
        out_specs=o_spec,
        compiler_params=pltpu.CompilerParams(
            dimension_semantics=("parallel", "parallel")),
    )(w_r, w_i, x_r, x_i)


def spectral_normalize(w, u, eps=1e-12):
    """Spectral normalization of w (Co2, Ci2) following
    torch.nn.utils.spectral_norm: one power iteration per forward using the
    persistent vector u. Returns (w / sigma, updated u)."""
    v = w.T @ u
    v = v / (jnp.linalg.norm(v) + eps)
    u_new = w @ v
    u_new = u_new / (jnp.linalg.norm(u_new) + eps)
    sigma = u_new @ (w @ v)
    return w / jnp.maximum(sigma, eps), u_new


def sn_fourier_unit(x, weight, u, *, lane_tile=1024):
    """x: (B, C_in, H, W) float32 (NCHW, as in the PyTorch module).
    weight: (2*C_out, 2*C_in) float32 (squeezed 1x1 conv kernel, no bias).
    u: (2*C_out,) persistent power-iteration vector (spectral_norm buffer).
    Returns (output (B, C_out, H, W), updated u)."""
    b, c, h, w = x.shape
    co2, ci2 = weight.shape
    c_out = co2 // 2
    assert ci2 == 2 * c

    # TODO(synk): no FFT primitive exists in Pallas/Mosaic; the spectral
    # transforms run through jnp.fft in the wrapper, only the 1x1 conv + ReLU
    # hot path runs in the Pallas kernel.
    ffted = jnp.fft.rfft2(x, s=(h, w), axes=(2, 3), norm="ortho")  # (B,C,H,Wf)
    wf = ffted.shape[-1]
    n = h * wf

    # Real / imag as separate contiguous slabs (no channel concat, no
    # transpose, no pad): the concat is folded into the weight column split.
    x_r = ffted.real.reshape(b, c, n)
    x_i = ffted.imag.reshape(b, c, n)

    # TODO(synk): the PyTorch forward calls torch.nn.utils.spectral_norm on a
    # Tensor (invalid -- it expects a Module); we implement the intended
    # semantics: spectrally normalize the 1x1 conv weight (1 power iteration
    # with a persistent u, as torch does per training forward).
    w_sn, u_new = spectral_normalize(weight, u)
    w_r = w_sn[:, :c]   # columns acting on the real part
    w_i = w_sn[:, c:]   # columns acting on the imag part

    y = conv1x1_relu(w_r, w_i, x_r, x_i, lane_tile=lane_tile)  # (B, 2Co, N)
    y = y.reshape(b, co2, h, wf)
    y_c = y[:, :c_out] + 1j * y[:, c_out:]
    out = jnp.fft.irfft2(y_c, s=(h, w), axes=(2, 3), norm="ortho")
    return out.astype(x.dtype), u_new


if __name__ == "__main__":
    key = jax.random.PRNGKey(0)
    kx, kw, ku = jax.random.split(key, 3)
    B, C_in, C_out, H, W = 2, 4, 4, 16, 16
    x = jax.random.normal(kx, (B, C_in, H, W), jnp.float32)

    # Conv2d(in=2*C_in, out=2*C_out, kernel_size=1, bias=False):
    # weight (2*C_out, 2*C_in, 1, 1) -> squeezed to (2*C_out, 2*C_in).
    fan_in = 2 * C_in
    weight = jax.random.uniform(
        kw, (2 * C_out, 2 * C_in), jnp.float32, minval=-1.0, maxval=1.0
    ) / jnp.sqrt(jnp.float32(fan_in))

    # Persistent spectral-norm power-iteration vector (torch keeps this as a
    # module buffer).
    u0 = jax.random.normal(ku, (2 * C_out,), jnp.float32)
    u0 = u0 / (jnp.linalg.norm(u0) + 1e-12)

    fwd = jax.jit(sn_fourier_unit)
    out, u1 = fwd(x, weight, u0)
    jax.block_until_ready(out)

    # Pure-JAX reference of the same forward for correctness.
    def ref_fwd(x, weight, u):
        ffted = jnp.fft.rfft2(x, s=(H, W), axes=(2, 3), norm="ortho")
        spec = jnp.concatenate([ffted.real, ffted.imag], axis=1)
        w_sn, _ = spectral_normalize(weight, u)
        y = jnp.maximum(jnp.einsum("oc,bchw->bohw", w_sn, spec), 0.0)
        y_c = y[:, :C_out] + 1j * y[:, C_out:]
        return jnp.fft.irfft2(y_c, s=(H, W), axes=(2, 3), norm="ortho")

    ref = ref_fwd(x, weight, u0)

    assert out.shape == (B, C_out, H, W), out.shape
    assert out.dtype == jnp.float32
    assert u1.shape == (2 * C_out,)
    assert jnp.allclose(out, ref, atol=1e-4, rtol=1e-4)
    print("KERNEL_OK")
</pallas_src>

<mosaic_0001>
module attributes {stable_mosaic.version = 11 : i64} {
  func.func @_conv1x1_relu_kernel(%arg0: i32, %arg1: i32, %arg2: memref<8x4xf32, #tpu.memory_space<vmem>>, %arg3: memref<8x4xf32, #tpu.memory_space<vmem>>, %arg4: memref<1x4x144xf32, #tpu.memory_space<vmem>>, %arg5: memref<1x4x144xf32, #tpu.memory_space<vmem>>, %arg6: memref<1x8x144xf32, #tpu.memory_space<vmem>>) attributes {dimension_semantics = [#tpu.dimension_semantics<parallel>, #tpu.dimension_semantics<parallel>], iteration_bounds = array<i64: 2, 1>, scalar_prefetch = 0 : i64, scratch_operands = 0 : i64, tpu.core_type = #tpu.core_type<tc>, window_params = [{pipeline_mode = #tpu.pipeline_mode<synchronous>, transform_indices = @transform_0, window_bounds = array<i64: 8, 4>}, {pipeline_mode = #tpu.pipeline_mode<synchronous>, transform_indices = @transform_1, window_bounds = array<i64: 8, 4>}, {transform_indices = @transform_2, window_bounds = array<i64: 1, 4, 144>}, {transform_indices = @transform_3, window_bounds = array<i64: 1, 4, 144>}, {transform_indices = @transform_4, window_bounds = array<i64: 1, 8, 144>}]} {
    %c0 = arith.constant 0 : index
    %c0_0 = arith.constant 0 : index
    %0 = vector.load %arg2[%c0, %c0_0] : memref<8x4xf32, #tpu.memory_space<vmem>>, vector<8x4xf32>
    %c0_1 = arith.constant 0 : index
    %c0_2 = arith.constant 0 : index
    %c0_3 = arith.constant 0 : index
    %1 = vector.load %arg4[%c0_1, %c0_2, %c0_3] : memref<1x4x144xf32, #tpu.memory_space<vmem>>, vector<1x4x144xf32>
    %2 = vector.shape_cast %1 : vector<1x4x144xf32> to vector<4x144xf32>
    %cst = arith.constant dense<0.000000e+00> : vector<8x144xf32>
    %3 = tpu.matmul %0, %2, %cst {dimension_numbers = #tpu.dot_dimension_numbers<[1], [0], [0], [1], [0, 0, 1, 1], [], []>} : vector<8x4xf32>, vector<4x144xf32>, vector<8x144xf32> -> vector<8x144xf32>
    %c0_4 = arith.constant 0 : index
    %c0_5 = arith.constant 0 : index
    %4 = vector.load %arg3[%c0_4, %c0_5] : memref<8x4xf32, #tpu.memory_space<vmem>>, vector<8x4xf32>
    %c0_6 = arith.constant 0 : index
    %c0_7 = arith.constant 0 : index
    %c0_8 = arith.constant 0 : index
    %5 = vector.load %arg5[%c0_6, %c0_7, %c0_8] : memref<1x4x144xf32, #tpu.memory_space<vmem>>, vector<1x4x144xf32>
    %6 = vector.shape_cast %5 : vector<1x4x144xf32> to vector<4x144xf32>
    %cst_9 = arith.constant dense<0.000000e+00> : vector<8x144xf32>
    %7 = tpu.matmul %4, %6, %cst_9 {dimension_numbers = #tpu.dot_dimension_numbers<[1], [0], [0], [1], [0, 0, 1, 1], [], []>} : vector<8x4xf32>, vector<4x144xf32>, vector<8x144xf32> -> vector<8x144xf32>
    %8 = arith.addf %3, %7 : vector<8x144xf32>
    %cst_10 = arith.constant 0.000000e+00 : f32
    %9 = vector.broadcast %cst_10 : f32 to vector<8x144xf32>
    %10 = arith.maximumf %8, %9 : vector<8x144xf32>
    %c0_11 = arith.constant 0 : index
    %c0_12 = arith.constant 0 : index
    %c0_13 = arith.constant 0 : index
    %11 = vector.load %arg6[%c0_11, %c0_12, %c0_13] : memref<1x8x144xf32, #tpu.memory_space<vmem>>, vector<1x8x144xf32>
    %12 = vector.shape_cast %11 : vector<1x8x144xf32> to vector<8x144xf32>
    %13 = vector.shape_cast %10 : vector<8x144xf32> to vector<1x8x144xf32>
    tpu.vector_store %arg6[%c0_11, %c0_12, %c0_13], %13 {strides = array<i32>} : memref<1x8x144xf32, #tpu.memory_space<vmem>>, vector<1x8x144xf32>,
    return
  }
  func.func @transform_0(%arg0: i32, %arg1: i32) -> (i32, i32) {
    %c0_i32 = arith.constant 0 : i32
    %c0_i32_0 = arith.constant 0 : i32
    %c0_i32_1 = arith.constant 0 : i32
    return %c0_i32, %c0_i32_0 : i32, i32
  }
  func.func @transform_1(%arg0: i32, %arg1: i32) -> (i32, i32) {
    %c0_i32 = arith.constant 0 : i32
    %c0_i32_0 = arith.constant 0 : i32
    %c0_i32_1 = arith.constant 0 : i32
    return %c0_i32, %c0_i32_0 : i32, i32
  }
  func.func @transform_2(%arg0: i32, %arg1: i32) -> (i32, i32, i32) {
    %c0_i32 = arith.constant 0 : i32
    %c0_i32_0 = arith.constant 0 : i32
    return %arg0, %c0_i32, %arg1 : i32, i32, i32
  }
  func.func @transform_3(%arg0: i32, %arg1: i32) -> (i32, i32, i32) {
    %c0_i32 = arith.constant 0 : i32
    %c0_i32_0 = arith.constant 0 : i32
    return %arg0, %c0_i32, %arg1 : i32, i32, i32
  }
  func.func @transform_4(%arg0: i32, %arg1: i32) -> (i32, i32, i32) {
    %c0_i32 = arith.constant 0 : i32
    %c0_i32_0 = arith.constant 0 : i32
    return %arg0, %c0_i32, %arg1 : i32, i32, i32
  }
}

</mosaic_0001>

<llo_original>
// kernel: reverse.0
$region0: #{reverse.0}
  %s0 = inlined_call_operand.vmem [shape: f32[2,4,16,7], index: 0, kind: input, shape index: {}]
  %s1 = inlined_call_operand.vmem [shape: f32[2,4,16,7], index: 1, kind: output, shape index: {}]
  $region1: #{reverse.0} parent=0
    #allocation0 [shape = 'u8[65536]{0}', space=vmem, size = 0x10000, scoped, tag = 'operand span for operand 0']
    #allocation1 [shape = 'u8[32768]{0}', space=vmem, size = 0x8000, scoped, tag = 'operand span for operand 1']
    %s2 = scalar_lea.vmem [#allocation0], 8
    // Predicated region
    $region2: #{reverse.0} parent=1 // pred_check
      _
    $region3: #{reverse.0} parent=1 // pred_check_branch
      %4 = sbr.rel (0) target = $region5
    $region4: #{reverse.0} parent=1 // pred_region
      // Predicated region
      $region6: #{reverse.0} parent=4 // pred_check
        _
      $region7: #{reverse.0} parent=4 // pred_check_branch
        %6 = sbr.rel (0) target = $region9
      $region8: #{reverse.0} parent=4 // pred_region
        // Predicated region
        $region21: #{reverse.0} parent=8 // pred_check
          _
        $region22: #{reverse.0} parent=8 // pred_check_branch
          %35 = sbr.rel (0) target = $region24
        $region23: #{reverse.0} parent=8 // pred_region
          loop: start=0, step=1, limit=1
          $region25: #{reverse.0} parent=23 // loop_pre_header
            _
          $region26: #{reverse.0} parent=23 // loop_header
            %s37 = sphi 0, %s41
            %p38 = scmp.ge.s32.totalorder %s37, 1
            %s42 = sphi %s0, %s0
            %s43 = sphi %s2, %s2
          $region27: #{reverse.0} parent=23 // loop_header_branch
            %40 = sbr.rel (%p38) target = $region31
          $region28: #{reverse.0} parent=23 // loop_body
            %v44 = vld [vmem:[%s42] sm:$0xff]
            %45 = vst [vmem:[%s43] sm:$0xff] %v44
            %v46 = vld [vmem:[%s42 + $0x8] sm:$0xff]
            %47 = vst [vmem:[%s43 + $0x10] sm:$0xff] %v46
            %v48 = vld [vmem:[%s42 + $0x10] sm:$0xff]
            %49 = vst [vmem:[%s43 + $0x20] sm:$0xff] %v48
            %v50 = vld [vmem:[%s42 + $0x18] sm:$0xff]
            %51 = vst [vmem:[%s43 + $0x30] sm:$0xff] %v50
            %v52 = vld [vmem:[%s42 + $0x20] sm:$0xff]
            %53 = vst [vmem:[%s43 + $0x40] sm:$0xff] %v52
            %v54 = vld [vmem:[%s42 + $0x28] sm:$0xff]
            %55 = vst [vmem:[%s43 + $0x50] sm:$0xff] %v54
            %v56 = vld [vmem:[%s42 + $0x30] sm:$0xff]
            %57 = vst [vmem:[%s43 + $0x60] sm:$0xff] %v56
            %v58 = vld [vmem:[%s42 + $0x38] sm:$0xff]
            %59 = vst [vmem:[%s43 + $0x70] sm:$0xff] %v58
          $region29: #{reverse.0} parent=23 // loop_footer
            %s41 = sadd.s32 1, %s37
          $region30: #{reverse.0} parent=23 // loop_footer_branch
            %36 = sbr.rel target = $region26
          $region31: #{reverse.0} parent=23 // loop_exit
            _
        $region24: #{reverse.0} parent=8 // pred_fallthru
          _
        // Predicated region
        $region32: #{reverse.0} parent=8 // pred_check
          _
        $region33: #{reverse.0} parent=8 // pred_check_branch
          %61 = sbr.rel target = $region35
        $region34: #{reverse.0} parent=8 // pred_region
          _
        $region35: #{reverse.0} parent=8 // pred_fallthru
          _
      $region9: #{reverse.0} parent=4 // pred_fallthru
        _
      // Predicated region
      $region10: #{reverse.0} parent=4 // pred_check
        _
      $region11: #{reverse.0} parent=4 // pred_check_branch
        %8 = sbr.rel target = $region13
      $region12: #{reverse.0} parent=4 // pred_region
        loop: start=0, step=1, limit=1
        $region14: #{reverse.0} parent=12 // loop_pre_header
          _
        $region15: #{reverse.0} parent=12 // loop_header
          %s11 = sphi 0, %s15
          %p12 = scmp.ge.s32.totalorder %s11, 1
          %s16 = sphi %s0, %s0
          %s17 = sphi %s2, %s2
        $region16: #{reverse.0} parent=12 // loop_header_branch
          %14 = sbr.rel (%p12) target = $region20
        $region17: #{reverse.0} parent=12 // loop_body
          %v18 = vld [vmem:[%s16] sm:$0xff]
          %19 = vst [vmem:[%s17] sm:$0xff] %v18
          %v20 = vld [vmem:[%s16 + $0x8] sm:$0xff]
          %21 = vst [vmem:[%s17 + $0x10] sm:$0xff] %v20
          %v22 = vld [vmem:[%s16 + $0x10] sm:$0xff]
          %23 = vst [vmem:[%s17 + $0x20] sm:$0xff] %v22
          %v24 = vld [vmem:[%s16 + $0x18] sm:$0xff]
          %25 = vst [vmem:[%s17 + $0x30] sm:$0xff] %v24
          %v26 = vld [vmem:[%s16 + $0x20] sm:$0xff]
          %27 = vst [vmem:[%s17 + $0x40] sm:$0xff] %v26
          %v28 = vld [vmem:[%s16 + $0x28] sm:$0xff]
          %29 = vst [vmem:[%s17 + $0x50] sm:$0xff] %v28
          %v30 = vld [vmem:[%s16 + $0x30] sm:$0xff]
          %31 = vst [vmem:[%s17 + $0x60] sm:$0xff] %v30
          %v32 = vld [vmem:[%s16 + $0x38] sm:$0xff]
          %33 = vst [vmem:[%s17 + $0x70] sm:$0xff] %v32
        $region18: #{reverse.0} parent=12 // loop_footer
          %s15 = sadd.s32 1, %s11
        $region19: #{reverse.0} parent=12 // loop_footer_branch
          %10 = sbr.rel target = $region15
        $region20: #{reverse.0} parent=12 // loop_exit
          _
      $region13: #{reverse.0} parent=4 // pred_fallthru
        _
    $region5: #{reverse.0} parent=1 // pred_fallthru
      _
    %62 = vnop
    %s63 = scalar_lea.vmem [#allocation0], 7
    %v64 = vld [vmem:[%s63] ss:$-1 sm:$0xff]
    %v65 = vrot.slane %v64, 1
    %66 = vst [vmem:[#allocation1] sm:$0xff] %v65
    %s67 = scalar_lea.vmem [#allocation0], 8
    %s68 = scalar_lea.vmem %s67, 7 [#allocation0]
    %v69 = vld [vmem:[%s68] ss:$-1 sm:$0xff]
    %v70 = vrot.slane %v69, 1
    %v71 = vlaneseq
    %v72 = vshrl.u32 %v71, 7
    %vm73 = vcmp.lt.s32.totalorder %v72, 7
    %74 = vst.msk [vmem:[#allocation1] sm:$0xff] %vm73, %v70
    %s75 = scalar_lea.vmem [#allocation1], 8
    %s76 = scalar_lea.vmem [#allocation0], 16
    %s77 = scalar_lea.vmem %s76, 7 [#allocation0]
    %v78 = vld [vmem:[%s77] ss:$-1 sm:$0xff]
    %v79 = vrot.slane %v78, 1
    %80 = vst [vmem:[%s75] sm:$0xff] %v79
    %s81 = scalar_lea.vmem %s76, 8 [#allocation0]
    %s82 = scalar_lea.vmem %s81, 7 [#allocation0]
    %v83 = vld [vmem:[%s82] ss:$-1 sm:$0xff]
    %v84 = vrot.slane %v83, 1
    %v85 = vlaneseq
    %v86 = vshrl.u32 %v85, 7
    %vm87 = vcmp.lt.s32.totalorder %v86, 7
    %88 = vst.msk [vmem:[%s75] sm:$0xff] %vm87, %v84
    %s89 = scalar_lea.vmem [#allocation1], 16
    %s90 = scalar_lea.vmem [#allocation0], 32
    %s91 = scalar_lea.vmem %s90, 7 [#allocation0]
    %v92 = vld [vmem:[%s91] ss:$-1 sm:$0xff]
    %v93 = vrot.slane %v92, 1
    %94 = vst [vmem:[%s89] sm:$0xff] %v93
    %s95 = scalar_lea.vmem %s90, 8 [#allocation0]
    %s96 = scalar_lea.vmem %s95, 7 [#allocation0]
    %v97 = vld [vmem:[%s96] ss:$-1 sm:$0xff]
    %v98 = vrot.slane %v97, 1
    %v99 = vlaneseq
    %v100 = vshrl.u32 %v99, 7
    %vm101 = vcmp.lt.s32.totalorder %v100, 7
    %102 = vst.msk [vmem:[%s89] sm:$0xff] %vm101, %v98
    %s103 = scalar_lea.vmem [#allocation1], 24
    %s104 = scalar_lea.vmem [#allocation0], 48
    %s105 = scalar_lea.vmem %s104, 7 [#allocation0]
    %v106 = vld [vmem:[%s105] ss:$-1 sm:$0xff]
    %v107 = vrot.slane %v106, 1
    %108 = vst [vmem:[%s103] sm:$0xff] %v107
    %s109 = scalar_lea.vmem %s104, 8 [#allocation0]
    %s110 = scalar_lea.vmem %s109, 7 [#allocation0]
    %v111 = vld [vmem:[%s110] ss:$-1 sm:$0xff]
    %v112 = vrot.slane %v111, 1
    %v113 = vlaneseq
    %v114 = vshrl.u32 %v113, 7
    %vm115 = vcmp.lt.s32.totalorder %v114, 7
    %116 = vst.msk [vmem:[%s103] sm:$0xff] %vm115, %v112
    %s117 = scalar_lea.vmem [#allocation1], 32
    %s118 = scalar_lea.vmem [#allocation0], 64
    %s119 = scalar_lea.vmem %s118, 7 [#allocation0]
    %v120 = vld [vmem:[%s119] ss:$-1 sm:$0xff]
    %v121 = vrot.slane %v120, 1
    %122 = vst [vmem:[%s117] sm:$0xff] %v121
    %s123 = scalar_lea.vmem %s118, 8 [#allocation0]
    %s124 = scalar_lea.vmem %s123, 7 [#allocation0]
    %v125 = vld [vmem:[%s124] ss:$-1 sm:$0xff]
    %v126 = vrot.slane %v125, 1
    %v127 = vlaneseq
    %v128 = vshrl.u32 %v127, 7
    %vm129 = vcmp.lt.s32.totalorder %v128, 7
    %130 = vst.msk [vmem:[%s117] sm:$0xff] %vm129, %v126
    %s131 = scalar_lea.vmem [#allocation1], 40
    %s132 = scalar_lea.vmem [#allocation0], 80
    %s133 = scalar_lea.vmem %s132, 7 [#allocation0]
    %v134 = vld [vmem:[%s133] ss:$-1 sm:$0xff]
    %v135 = vrot.slane %v134, 1
    %136 = vst [vmem:[%s131] sm:$0xff] %v135
    %s137 = scalar_lea.vmem %s132, 8 [#allocation0]
    %s138 = scalar_lea.vmem %s137, 7 [#allocation0]
    %v139 = vld [vmem:[%s138] ss:$-1 sm:$0xff]
    %v140 = vrot.slane %v139, 1
    %v141 = vlaneseq
    %v142 = vshrl.u32 %v141, 7
    %vm143 = vcmp.lt.s32.totalorder %v142, 7
    %144 = vst.msk [vmem:[%s131] sm:$0xff] %vm143, %v140
    %s145 = scalar_lea.vmem [#allocation1], 48
    %s146 = scalar_lea.vmem [#allocation0], 96
    %s147 = scalar_lea.vmem %s146, 7 [#allocation0]
    %v148 = vld [vmem:[%s147] ss:$-1 sm:$0xff]
    %v149 = vrot.slane %v148, 1
    %150 = vst [vmem:[%s145] sm:$0xff] %v149
    %s151 = scalar_lea.vmem %s146, 8 [#allocation0]
    %s152 = scalar_lea.vmem %s151, 7 [#allocation0]
    %v153 = vld [vmem:[%s152] ss:$-1 sm:$0xff]
    %v154 = vrot.slane %v153, 1
    %v155 = vlaneseq
    %v156 = vshrl.u32 %v155, 7
    %vm157 = vcmp.lt.s32.totalorder %v156, 7
    %158 = vst.msk [vmem:[%s145] sm:$0xff] %vm157, %v154
    %s159 = scalar_lea.vmem [#allocation1], 56
    %s160 = scalar_lea.vmem [#allocation0], 112
    %s161 = scalar_lea.vmem %s160, 7 [#allocation0]
    %v162 = vld [vmem:[%s161] ss:$-1 sm:$0xff]
    %v163 = vrot.slane %v162, 1
    %164 = vst [vmem:[%s159] sm:$0xff] %v163
    %s165 = scalar_lea.vmem %s160, 8 [#allocation0]
    %s166 = scalar_lea.vmem %s165, 7 [#allocation0]
    %v167 = vld [vmem:[%s166] ss:$-1 sm:$0xff]
    %v168 = vrot.slane %v167, 1
    %v169 = vlaneseq
    %v170 = vshrl.u32 %v169, 7
    %vm171 = vcmp.lt.s32.totalorder %v170, 7
    %172 = vst.msk [vmem:[%s159] sm:$0xff] %vm171, %v168
    // Predicated region
    $region36: #{reverse.0} parent=1 // pred_check
      _
    $region37: #{reverse.0} parent=1 // pred_check_branch
      %174 = sbr.rel (0) target = $region39
    $region38: #{reverse.0} parent=1 // pred_region
      // Predicated region
      $region40: #{reverse.0} parent=38 // pred_check
        _
      $region41: #{reverse.0} parent=38 // pred_check_branch
        %176 = sbr.rel (0) target = $region43
      $region42: #{reverse.0} parent=38 // pred_region
        // Predicated region
        $region55: #{reverse.0} parent=42 // pred_check
          _
        $region56: #{reverse.0} parent=42 // pred_check_branch
          %205 = sbr.rel (0) target = $region58
        $region57: #{reverse.0} parent=42 // pred_region
          loop: start=0, step=1, limit=1
          $region59: #{reverse.0} parent=57 // loop_pre_header
            _
          $region60: #{reverse.0} parent=57 // loop_header
            %s207 = sphi 0, %s211
            %p208 = scmp.ge.s32.totalorder %s207, 1
            %s212 = sphi [#allocation1], [#allocation1]
            %s213 = sphi %s1, %s1
          $region61: #{reverse.0} parent=57 // loop_header_branch
            %210 = sbr.rel (%p208) target = $region65
          $region62: #{reverse.0} parent=57 // loop_body
            %v214 = vld [vmem:[%s212] sm:$0xff]
            %215 = vst [vmem:[%s213] sm:$0xff] %v214
            %v216 = vld [vmem:[%s212 + $0x8] sm:$0xff]
            %217 = vst [vmem:[%s213 + $0x8] sm:$0xff] %v216
            %v218 = vld [vmem:[%s212 + $0x10] sm:$0xff]
            %219 = vst [vmem:[%s213 + $0x10] sm:$0xff] %v218
            %v220 = vld [vmem:[%s212 + $0x18] sm:$0xff]
            %221 = vst [vmem:[%s213 + $0x18] sm:$0xff] %v220
            %v222 = vld [vmem:[%s212 + $0x20] sm:$0xff]
            %223 = vst [vmem:[%s213 + $0x20] sm:$0xff] %v222
            %v224 = vld [vmem:[%s212 + $0x28] sm:$0xff]
            %225 = vst [vmem:[%s213 + $0x28] sm:$0xff] %v224
            %v226 = vld [vmem:[%s212 + $0x30] sm:$0xff]
            %227 = vst [vmem:[%s213 + $0x30] sm:$0xff] %v226
            %v228 = vld [vmem:[%s212 + $0x38] sm:$0xff]
            %229 = vst [vmem:[%s213 + $0x38] sm:$0xff] %v228
          $region63: #{reverse.0} parent=57 // loop_footer
            %s211 = sadd.s32 1, %s207
          $region64: #{reverse.0} parent=57 // loop_footer_branch
            %206 = sbr.rel target = $region60
          $region65: #{reverse.0} parent=57 // loop_exit
            _
        $region58: #{reverse.0} parent=42 // pred_fallthru
          _
        // Predicated region
        $region66: #{reverse.0} parent=42 // pred_check
          _
        $region67: #{reverse.0} parent=42 // pred_check_branch
          %231 = sbr.rel target = $region69
        $region68: #{reverse.0} parent=42 // pred_region
          _
        $region69: #{reverse.0} parent=42 // pred_fallthru
          _
      $region43: #{reverse.0} parent=38 // pred_fallthru
        _
      // Predicated region
      $region44: #{reverse.0} parent=38 // pred_check
        _
      $region45: #{reverse.0} parent=38 // pred_check_branch
        %178 = sbr.rel target = $region47
      $region46: #{reverse.0} parent=38 // pred_region
        loop: start=0, step=1, limit=1
        $region48: #{reverse.0} parent=46 // loop_pre_header
          _
        $region49: #{reverse.0} parent=46 // loop_header
          %s181 = sphi 0, %s185
          %p182 = scmp.ge.s32.totalorder %s181, 1
          %s186 = sphi [#allocation1], [#allocation1]
          %s187 = sphi %s1, %s1
        $region50: #{reverse.0} parent=46 // loop_header_branch
          %184 = sbr.rel (%p182) target = $region54
        $region51: #{reverse.0} parent=46 // loop_body
          %v188 = vld [vmem:[%s186] sm:$0xff]
          %189 = vst [vmem:[%s187] sm:$0xff] %v188
          %v190 = vld [vmem:[%s186 + $0x8] sm:$0xff]
          %191 = vst [vmem:[%s187 + $0x8] sm:$0xff] %v190
          %v192 = vld [vmem:[%s186 + $0x10] sm:$0xff]
          %193 = vst [vmem:[%s187 + $0x10] sm:$0xff] %v192
          %v194 = vld [vmem:[%s186 + $0x18] sm:$0xff]
          %195 = vst [vmem:[%s187 + $0x18] sm:$0xff] %v194
          %v196 = vld [vmem:[%s186 + $0x20] sm:$0xff]
          %197 = vst [vmem:[%s187 + $0x20] sm:$0xff] %v196
          %v198 = vld [vmem:[%s186 + $0x28] sm:$0xff]
          %199 = vst [vmem:[%s187 + $0x28] sm:$0xff] %v198
          %v200 = vld [vmem:[%s186 + $0x30] sm:$0xff]
          %201 = vst [vmem:[%s187 + $0x30] sm:$0xff] %v200
          %v202 = vld [vmem:[%s186 + $0x38] sm:$0xff]
          %203 = vst [vmem:[%s187 + $0x38] sm:$0xff] %v202
        $region52: #{reverse.0} parent=46 // loop_footer
          %s185 = sadd.s32 1, %s181
        $region53: #{reverse.0} parent=46 // loop_footer_branch
          %180 = sbr.rel target = $region49
        $region54: #{reverse.0} parent=46 // loop_exit
          _
      $region47: #{reverse.0} parent=38 // pred_fallthru
        _
    $region39: #{reverse.0} parent=1 // pred_fallthru
      _
    %232 = vnop

// kernel: sn_fourier_unit.1
$region0: #{sn_fourier_unit.1}
  #allocation0 [shape = 'u32[]', space=smem, size = 0x4, offset = 0x4, fixed_abs, tag = 'smem constant byte address 0x4 - core index']
  #allocation1 [shape = 'u32[144,128]{1,0:T(1,128)}', space=vmem, size = 0x12000, scoped, tag = 'internal scratch']
  %s0 = inlined_call_operand.vmem [shape: f32[8,4], index: 0, kind: input, shape index: {}]
  %s1 = inlined_call_operand.vmem [shape: f32[8,4], index: 1, kind: input, shape index: {}]
  %s2 = inlined_call_operand.vmem [shape: f32[2,4,144], index: 2, kind: input, shape index: {}]
  %s3 = inlined_call_operand.vmem [shape: f32[2,4,144], index: 3, kind: input, shape index: {}]
  %s4 = inlined_call_operand.vmem [shape: f32[2,8,144], index: 4, kind: output, shape index: {}]
  %s5 = sld [smem:[#allocation0]]
  $region49: #{sn_fourier_unit.1} parent=0
    _
  %s7 = ssub.s32 1, %s5
  %s8 = scalar_select 0, %s7, %s5
  loop: start=0, step=1, limit=4
  $region2: #{sn_fourier_unit.1} parent=0 // loop_pre_header
    _
  $region3: #{sn_fourier_unit.1} parent=0 // loop_header
    %s10 = sphi 0, %s14
    %p11 = scmp.ge.s32.totalorder %s10, 4
    %s17 = sphi 0, %s29
    %s18 = sphi 0, %s25
    %s19 = sphi 0, %s17
    %s20 = sphi 0, %s18
    %s21 = sphi 0, %s19
    %s22 = sphi 0, %s20
    %s30 = sphi 0, %s30
    %s32 = sphi 0, %s30
    %s33 = sphi 0, %s32
    %s47 = sphi 0, %s33
    %s51 = sphi 0, %s51
    %s53 = sphi 0, %s51
    %s54 = sphi 0, %s53
    %s68 = sphi 0, %s54
    %s76 = sphi 0, %s78
    %s79 = sphi 0, %s76
    %s80 = sphi 0, %s79
    %s96 = sphi 0, %s80
    %s104 = sphi 0, %s106
    %s107 = sphi 0, %s104
    %s108 = sphi 0, %s107
    %s124 = sphi 0, %s108
    %s132 = sphi 0, %s134
    %s135 = sphi 0, %s132
    %s136 = sphi 0, %s135
    %s152 = sphi 0, %s136
  $region4: #{sn_fourier_unit.1} parent=0 // loop_header_branch
    %13 = sbr.rel (%p11) target = $region8
  $region5: #{sn_fourier_unit.1} parent=0 // loop_body
    %s15 = ssub.s32 %s10, 1
    %s16 = ssub.s32 %s10, 2
    %s23 = sadd.s32 1, %s18
    %p24 = scmp.ge.s32.totalorder %s23, 1
    %s25 = scalar_select %p24, 0, %s23
    %s26 = sadd.s32 1, %s17
    %s27 = scalar_select %p24, %s26, %s17
    %p28 = scmp.ge.s32.totalorder %s27, 2
    %s29 = scalar_select %p28, 0, %s27
    %s31 = sadd.s32 %s30, 1
    %p34 = scmp.eq.s32.totalorder %s10, 1
    %p35 = scmp.ne.s32.totalorder %s30, %s32
    %p36 = scmp.eq.s32.totalorder %s10, 0
    %p37 = por %p35, %p36
    %p38 = scmp.ne.s32.totalorder %s30, %s32
    %p39 = scmp.eq.s32.totalorder %s15, 1
    %p40 = por %p38, %p39
    %p41 = scmp.ne.s32.totalorder %s32, %s33
    %p42 = scmp.eq.s32.totalorder %s15, 0
    %p43 = por %p41, %p42
    %p44 = scmp.ne.s32.totalorder %s32, %s33
    %p45 = scmp.eq.s32.totalorder %s16, 1
    %p46 = por %p44, %p45
    %p48 = scmp.ne.s32.totalorder %s33, %s47
    %p49 = scmp.eq.s32.totalorder %s16, 0
    %p50 = por %p48, %p49
    %s52 = sadd.s32 %s51, 1
    %p55 = scmp.eq.s32.totalorder %s10, 1
    %p56 = scmp.ne.s32.totalorder %s51, %s53
    %p57 = scmp.eq.s32.totalorder %s10, 0
    %p58 = por %p56, %p57
    %p59 = scmp.ne.s32.totalorder %s51, %s53
    %p60 = scmp.eq.s32.totalorder %s15, 1
    %p61 = por %p59, %p60
    %p62 = scmp.ne.s32.totalorder %s53, %s54
    %p63 = scmp.eq.s32.totalorder %s15, 0
    %p64 = por %p62, %p63
    %p65 = scmp.ne.s32.totalorder %s53, %s54
    %p66 = scmp.eq.s32.totalorder %s16, 1
    %p67 = por %p65, %p66
    %p69 = scmp.ne.s32.totalorder %s54, %s68
    %p70 = scmp.eq.s32.totalorder %s16, 0
    %p71 = por %p69, %p70
    %s72 = ssub.s32 %s17, %s29
    %s73 = ssub.s32 %s18, %s25
    %s74 = sor.u32 %s72, %s73
    %p75 = scmp.eq.s32.totalorder %s74, 0
    %s77 = sadd.s32 %s76, 1
    %s78 = scalar_select %p75, %s76, %s77
    %p81 = pneg %p75
    %p82 = scmp.eq.s32.totalorder %s10, 1
    %p83 = por %p81, %p82
    %p84 = scmp.ne.s32.totalorder %s76, %s79
    %p85 = scmp.eq.s32.totalorder %s10, 0
    %p86 = por %p84, %p85
    %p87 = scmp.ne.s32.totalorder %s76, %s79
    %p88 = scmp.eq.s32.totalorder %s15, 1
    %p89 = por %p87, %p88
    %p90 = scmp.ne.s32.totalorder %s79, %s80
    %p91 = scmp.eq.s32.totalorder %s15, 0
    %p92 = por %p90, %p91
    %p93 = scmp.ne.s32.totalorder %s79, %s80
    %p94 = scmp.eq.s32.totalorder %s16, 1
    %p95 = por %p93, %p94
    %p97 = scmp.ne.s32.totalorder %s80, %s96
    %p98 = scmp.eq.s32.totalorder %s16, 0
    %p99 = por %p97, %p98
    %s100 = ssub.s32 %s17, %s29
    %s101 = ssub.s32 %s18, %s25
    %s102 = sor.u32 %s100, %s101
    %p103 = scmp.eq.s32.totalorder %s102, 0
    %s105 = sadd.s32 %s104, 1
    %s106 = scalar_select %p103, %s104, %s105
    %p109 = pneg %p103
    %p110 = scmp.eq.s32.totalorder %s10, 1
    %p111 = por %p109, %p110
    %p112 = scmp.ne.s32.totalorder %s104, %s107
    %p113 = scmp.eq.s32.totalorder %s10, 0
    %p114 = por %p112, %p113
    %p115 = scmp.ne.s32.totalorder %s104, %s107
    %p116 = scmp.eq.s32.totalorder %s15, 1
    %p117 = por %p115, %p116
    %p118 = scmp.ne.s32.totalorder %s107, %s108
    %p119 = scmp.eq.s32.totalorder %s15, 0
    %p120 = por %p118, %p119
    %p121 = scmp.ne.s32.totalorder %s107, %s108
    %p122 = scmp.eq.s32.totalorder %s16, 1
    %p123 = por %p121, %p122
    %p125 = scmp.ne.s32.totalorder %s108, %s124
    %p126 = scmp.eq.s32.totalorder %s16, 0
    %p127 = por %p125, %p126
    %s128 = ssub.s32 %s17, %s29
    %s129 = ssub.s32 %s18, %s25
    %s130 = sor.u32 %s128, %s129
    %p131 = scmp.eq.s32.totalorder %s130, 0
    %s133 = sadd.s32 %s132, 1
    %s134 = scalar_select %p131, %s132, %s133
    %p137 = pneg %p131
    %p138 = scmp.eq.s32.totalorder %s10, 1
    %p139 = por %p137, %p138
    %p140 = scmp.ne.s32.totalorder %s132, %s135
    %p141 = scmp.eq.s32.totalorder %s10, 0
    %p142 = por %p140, %p141
    %p143 = scmp.ne.s32.totalorder %s132, %s135
    %p144 = scmp.eq.s32.totalorder %s15, 1
    %p145 = por %p143, %p144
    %p146 = scmp.ne.s32.totalorder %s135, %s136
    %p147 = scmp.eq.s32.totalorder %s15, 0
    %p148 = por %p146, %p147
    %p149 = scmp.ne.s32.totalorder %s135, %s136
    %p150 = scmp.eq.s32.totalorder %s16, 1
    %p151 = por %p149, %p150
    %p153 = scmp.ne.s32.totalorder %s136, %s152
    %p154 = scmp.eq.s32.totalorder %s16, 0
    %p155 = por %p153, %p154
    %p156 = scmp.le.s32.totalorder 1, %s10
    %p157 = scmp.lt.s32.totalorder %s10, 3
    %p158 = pnand %p156, %p157
    %p159 = pneg %p158
    // Predicated region
    $region9: #{sn_fourier_unit.1} parent=5 // pred_check
      _
    $region10: #{sn_fourier_unit.1} parent=5 // pred_check_branch
      %161 = sbr.rel (%p158) target = $region12
    $region11: #{sn_fourier_unit.1} parent=5 // pred_region
      %s162 = ssub.s32 %s10, 1
      // Predicated region
      $region13: #{sn_fourier_unit.1} parent=11 // pred_check
        %p163 = pneg %p43
      $region14: #{sn_fourier_unit.1} parent=11 // pred_check_branch
        %165 = sbr.rel (%p163) target = $region16
      $region15: #{sn_fourier_unit.1} parent=11 // pred_region
        _
      $region16: #{sn_fourier_unit.1} parent=11 // pred_fallthru
        _
      // Predicated region
      $region17: #{sn_fourier_unit.1} parent=11 // pred_check
        %p166 = pneg %p64
      $region18: #{sn_fourier_unit.1} parent=11 // pred_check_branch
        %168 = sbr.rel (%p166) target = $region20
      $region19: #{sn_fourier_unit.1} parent=11 // pred_region
        _
      $region20: #{sn_fourier_unit.1} parent=11 // pred_fallthru
        _
    $region12: #{sn_fourier_unit.1} parent=5 // pred_fallthru
      _
    %p169 = scmp.lt.s32.totalorder %s10, 2
    // Predicated region
    $region21: #{sn_fourier_unit.1} parent=5 // pred_check
      %p170 = pneg %p169
    $region22: #{sn_fourier_unit.1} parent=5 // pred_check_branch
      %172 = sbr.rel (%p170) target = $region24
    $region23: #{sn_fourier_unit.1} parent=5 // pred_region
      // Predicated region
      $region25: #{sn_fourier_unit.1} parent=23 // pred_check
        %p173 = pneg %p86
      $region26: #{sn_fourier_unit.1} parent=23 // pred_check_branch
        %175 = sbr.rel (%p173) target = $region28
      $region27: #{sn_fourier_unit.1} parent=23 // pred_region
        %s176 = smul.u32 2, %s18
        %p177 = scmp.lt.s32.totalorder %s17, 1
        %s178 = scalar_select %p177, %s17, 1
        %p179 = scmp.lt.s32.totalorder %s176, 1
        %s180 = scalar_select %p179, %s176, 1
        %s181 = smul.addr %s178, 2
        %s182 = sadd.s32 %s180, %s181
        %s183 = smul.addr %s182, 4
        %s184 = scalar_lea.vmem %s2, %s183
        %s185 = smul.u32 2, %s18
      $region28: #{sn_fourier_unit.1} parent=23 // pred_fallthru
        _
      // Predicated region
      $region29: #{sn_fourier_unit.1} parent=23 // pred_check
        %p186 = pneg %p114
      $region30: #{sn_fourier_unit.1} parent=23 // pred_check_branch
        %188 = sbr.rel (%p186) target = $region32
      $region31: #{sn_fourier_unit.1} parent=23 // pred_region
        %s189 = smul.u32 2, %s18
        %p190 = scmp.lt.s32.totalorder %s17, 1
        %s191 = scalar_select %p190, %s17, 1
        %p192 = scmp.lt.s32.totalorder %s189, 1
        %s193 = scalar_select %p192, %s189, 1
        %s194 = smul.addr %s191, 2
        %s195 = sadd.s32 %s193, %s194
        %s196 = smul.addr %s195, 4
        %s197 = scalar_lea.vmem %s3, %s196
        %s198 = smul.u32 2, %s18
      $region32: #{sn_fourier_unit.1} parent=23 // pred_fallthru
        _
    $region24: #{sn_fourier_unit.1} parent=5 // pred_fallthru
      _
    %p199 = scmp.le.s32.totalorder 1, %s10
    %p200 = scmp.lt.s32.totalorder %s10, 3
    %p201 = pnand %p199, %p200
    %p202 = pneg %p201
    // Predicated region
    $region33: #{sn_fourier_unit.1} parent=5 // pred_check
      _
    $region34: #{sn_fourier_unit.1} parent=5 // pred_check_branch
      %204 = sbr.rel (%p201) target = $region36
    $region35: #{sn_fourier_unit.1} parent=5 // pred_region
      %s205 = ssub.s32 %s10, 1
      %p206 = pneg %p43
      %p207 = pneg %p40
      %p208 = pneg %p64
      %p209 = pneg %p61
      %s210 = smul.u32 2, %s20
      %p211 = scmp.lt.s32.totalorder %s19, 1
      %s212 = scalar_select %p211, %s19, 1
      %p213 = scmp.lt.s32.totalorder %s210, 1
      %s214 = scalar_select %p213, %s210, 1
      %s215 = smul.addr %s212, 2
      %s216 = sadd.s32 %s214, %s215
      %s217 = smul.addr %s216, 4
      %s218 = scalar_lea.vmem %s2, %s217
      %p219 = pneg %p92
      %p220 = pneg %p89
      %s221 = smul.u32 2, %s20
      %p222 = scmp.lt.s32.totalorder %s19, 1
      %s223 = scalar_select %p222, %s19, 1
      %p224 = scmp.lt.s32.totalorder %s221, 1
      %s225 = scalar_select %p224, %s221, 1
      %s226 = smul.addr %s223, 2
      %s227 = sadd.s32 %s225, %s226
      %s228 = smul.addr %s227, 4
      %s229 = scalar_lea.vmem %s3, %s228
      %p230 = pneg %p120
      %p231 = pneg %p117
      %p232 = pneg %p148
      %p233 = pneg %p145
      %s234 = smul.u32 2, %s20
      %p235 = scmp.lt.s32.totalorder %s19, 1
      %s236 = scalar_select %p235, %s19, 1
      %p237 = scmp.lt.s32.totalorder %s234, 1
      %s238 = scalar_select %p237, %s234, 1
      %s239 = smul.addr %s236, 2
      %s240 = sadd.s32 %s238, %s239
      %s241 = smul.addr %s240, 8
      %s242 = scalar_lea.vmem %s4, %s241
      %s243 = smul.u32 2, %s20
      %p244 = scmp.lt.s32.totalorder %s19, 1
      %s245 = scalar_select %p244, %s19, 1
      %p246 = scmp.lt.s32.totalorder %s243, 1
      %s247 = scalar_select %p246, %s243, 1
      %s248 = smul.addr %s245, 2
      %s249 = sadd.s32 %s247, %s248
      %s250 = smul.addr %s249, 4
      %s251 = scalar_lea.vmem %s2, %s250
      %s252 = smul.u32 2, %s20
      %s253 = smul.u32 2, %s20
      %p254 = scmp.lt.s32.totalorder %s19, 1
      %s255 = scalar_select %p254, %s19, 1
      %p256 = scmp.lt.s32.totalorder %s253, 1
      %s257 = scalar_select %p256, %s253, 1
      %s258 = smul.addr %s255, 2
      %s259 = sadd.s32 %s257, %s258
      %s260 = smul.addr %s259, 4
      %s261 = scalar_lea.vmem %s3, %s260
      %s262 = smul.u32 2, %s20
      %s263 = smul.u32 2, %s20
      %p264 = scmp.lt.s32.totalorder %s19, 1
      %s265 = scalar_select %p264, %s19, 1
      %p266 = scmp.lt.s32.totalorder %s263, 1
      %s267 = scalar_select %p266, %s263, 1
      %s268 = smul.addr %s265, 2
      %s269 = sadd.s32 %s267, %s268
      %s270 = smul.addr %s269, 8
      %s271 = scalar_lea.vmem %s4, %s270
      %s272 = smul.u32 2, %s20
      %v273 = vld [vmem:[%s0] sm:$0xff]
      %v274 = vld [vmem:[%s251] sm:$0xff]
      %v275 = vld [vmem:[%s1] sm:$0xff]
      %v276 = vld [vmem:[%s261] sm:$0xff]
      %v278 = vcombine.high %v276, %v276
      %vm279 = vcmask 31744
      %v281 = vsel %vm279, %v275, 0
      %vm283 = vcmask 1043456
      %v284 = vsel %vm283, %v276, 0
      %v286 = vsel %vm283, %v278, 0
      %288 = vmatprep.subr.mxu0 %v286
      %289 = vmatpush1.msra.mxu0 %v284
      %290 = vmatprep.subr.mxu0 0.0
      %291 = vmatpush1.msra.mxu0 0.0
      %292 = vmatprep.subr.mxu0 0.0
      %293 = vmatpush1.msra.mxu0 0.0
      %294 = vmatprep.subr.mxu0 0.0
      %295 = vmatpush1.msra.mxu0 0.0
      %296 = vmatprep.subr.mxu0 0.0
      %297 = vmatpush1.msra.mxu0 0.0
      %298 = vmatprep.subr.mxu0 0.0
      %299 = vmatpush1.msra.mxu0 0.0
      %300 = vmatprep.subr.mxu0 0.0
      %301 = vmatpush1.msra.mxu0 0.0
      %302 = vmatprep.subr.mxu0 0.0
      %303 = vmatpush1.msra.mxu0 0.0
      %304 = vmatprep.subr.mxu0 0.0
      %305 = vmatpush1.msra.mxu0 0.0
      %306 = vmatprep.subr.mxu0 0.0
      %307 = vmatpush1.msra.mxu0 0.0
      %308 = vmatprep.subr.mxu0 0.0
      %309 = vmatpush1.msra.mxu0 0.0
      %310 = vmatprep.subr.mxu0 0.0
      %311 = vmatpush1.msra.mxu0 0.0
      %312 = vmatprep.subr.mxu0 0.0
      %313 = vmatpush1.msra.mxu0 0.0
      %314 = vmatprep.subr.mxu0 0.0
      %315 = vmatpush1.msra.mxu0 0.0
      %316 = vmatprep.subr.mxu0 0.0
      %317 = vmatpush1.msra.mxu0 0.0
      %318 = vmatprep.subr.mxu0 0.0
      %319 = vmatpush1.msra.mxu0 0.0
      %320 = vmatprep.subr.mxu0 0.0
      %321 = vmatpush1.msra.mxu0 0.0
      %322 = vmatprep.subr.mxu0 0.0
      %323 = vmatpush1.msra.mxu0 0.0
      %324 = vmatprep.subr.mxu0 0.0
      %325 = vmatpush1.msra.mxu0 0.0
      %326 = vmatprep.subr.mxu0 0.0
      %327 = vmatpush1.msra.mxu0 0.0
      %328 = vmatprep.subr.mxu0 0.0
      %329 = vmatpush1.msra.mxu0 0.0
      %330 = vmatprep.subr.mxu0 0.0
      %331 = vmatpush1.msra.mxu0 0.0
      %332 = vmatprep.subr.mxu0 0.0
      %333 = vmatpush1.msra.mxu0 0.0
      %334 = vmatprep.subr.mxu0 0.0
      %335 = vmatpush1.msra.mxu0 0.0
      %336 = vmatprep.subr.mxu0 0.0
      %337 = vmatpush1.msra.mxu0 0.0
      %338 = vmatprep.subr.mxu0 0.0
      %339 = vmatpush1.msra.mxu0 0.0
      %340 = vmatprep.subr.mxu0 0.0
      %341 = vmatpush1.msra.mxu0 0.0
      %342 = vmatprep.subr.mxu0 0.0
      %343 = vmatpush1.msra.mxu0 0.0
      %344 = vmatprep.subr.mxu0 0.0
      %345 = vmatpush1.msra.mxu0 0.0
      %346 = vmatprep.subr.mxu0 0.0
      %347 = vmatpush1.msra.mxu0 0.0
      %348 = vmatprep.subr.mxu0 0.0
      %349 = vmatpush1.msra.mxu0 0.0
      %350 = vmatprep.subr.mxu0 0.0
      %351 = vmatpush1.msra.mxu0 0.0
      %352 = vmatprep.mubr.f32.mxu0 0.0
      %353 = vmatmul.mubr.f32.gmra.mrb[0].mxu0 %v281
      %v354 = vpop.f32.mrb[0].mxu0
      %v355 = vadd.f32 0.0, %v354
      %v356 = vpop.f32.mrb[0].mxu0
      %v357 = vadd.f32 0.0, %v356
      %358 = vdwg.mxu0
      %v360 = vcombine.high %v274, %v274
      %v362 = vsel %vm279, %v273, 0
      %v364 = vsel %vm283, %v274, 0
      %v366 = vsel %vm283, %v360, 0
      %368 = vmatprep.subr.mxu0 %v366
      %369 = vmatpush1.msra.mxu0 %v364
      %370 = vmatprep.subr.mxu0 0.0
      %371 = vmatpush1.msra.mxu0 0.0
      %372 = vmatprep.subr.mxu0 0.0
      %373 = vmatpush1.msra.mxu0 0.0
      %374 = vmatprep.subr.mxu0 0.0
      %375 = vmatpush1.msra.mxu0 0.0
      %376 = vmatprep.subr.mxu0 0.0
      %377 = vmatpush1.msra.mxu0 0.0
      %378 = vmatprep.subr.mxu0 0.0
      %379 = vmatpush1.msra.mxu0 0.0
      %380 = vmatprep.subr.mxu0 0.0
      %381 = vmatpush1.msra.mxu0 0.0
      %382 = vmatprep.subr.mxu0 0.0
      %383 = vmatpush1.msra.mxu0 0.0
      %384 = vmatprep.subr.mxu0 0.0
      %385 = vmatpush1.msra.mxu0 0.0
      %386 = vmatprep.subr.mxu0 0.0
      %387 = vmatpush1.msra.mxu0 0.0
      %388 = vmatprep.subr.mxu0 0.0
      %389 = vmatpush1.msra.mxu0 0.0
      %390 = vmatprep.subr.mxu0 0.0
      %391 = vmatpush1.msra.mxu0 0.0
      %392 = vmatprep.subr.mxu0 0.0
      %393 = vmatpush1.msra.mxu0 0.0
      %394 = vmatprep.subr.mxu0 0.0
      %395 = vmatpush1.msra.mxu0 0.0
      %396 = vmatprep.subr.mxu0 0.0
      %397 = vmatpush1.msra.mxu0 0.0
      %398 = vmatprep.subr.mxu0 0.0
      %399 = vmatpush1.msra.mxu0 0.0
      %400 = vmatprep.subr.mxu0 0.0
      %401 = vmatpush1.msra.mxu0 0.0
      %402 = vmatprep.subr.mxu0 0.0
      %403 = vmatpush1.msra.mxu0 0.0
      %404 = vmatprep.subr.mxu0 0.0
      %405 = vmatpush1.msra.mxu0 0.0
      %406 = vmatprep.subr.mxu0 0.0
      %407 = vmatpush1.msra.mxu0 0.0
      %408 = vmatprep.subr.mxu0 0.0
      %409 = vmatpush1.msra.mxu0 0.0
      %410 = vmatprep.subr.mxu0 0.0
      %411 = vmatpush1.msra.mxu0 0.0
      %412 = vmatprep.subr.mxu0 0.0
      %413 = vmatpush1.msra.mxu0 0.0
      %414 = vmatprep.subr.mxu0 0.0
      %415 = vmatpush1.msra.mxu0 0.0
      %416 = vmatprep.subr.mxu0 0.0
      %417 = vmatpush1.msra.mxu0 0.0
      %418 = vmatprep.subr.mxu0 0.0
      %419 = vmatpush1.msra.mxu0 0.0
      %420 = vmatprep.subr.mxu0 0.0
      %421 = vmatpush1.msra.mxu0 0.0
      %422 = vmatprep.subr.mxu0 0.0
      %423 = vmatpush1.msra.mxu0 0.0
      %424 = vmatprep.subr.mxu0 0.0
      %425 = vmatpush1.msra.mxu0 0.0
      %426 = vmatprep.subr.mxu0 0.0
      %427 = vmatpush1.msra.mxu0 0.0
      %428 = vmatprep.subr.mxu0 0.0
      %429 = vmatpush1.msra.mxu0 0.0
      %430 = vmatprep.subr.mxu0 0.0
      %431 = vmatpush1.msra.mxu0 0.0
      %432 = vmatprep.mubr.f32.mxu0 0.0
      %433 = vmatmul.mubr.f32.gmra.mrb[0].mxu0 %v362
      %v434 = vpop.f32.mrb[0].mxu0
      %v435 = vadd.f32 %v355, %v434
      %v436 = vpop.f32.mrb[0].mxu0
      %v437 = vadd.f32 %v357, %v436
      %438 = vdwg.mxu0
      %v439 = vmax.f32 %v435, 0.0
      %v440 = vmax.f32 %v437, 0.0
      %441 = vst [vmem:[%s271] sm:$0xff] %v439
      %vm442 = vcmask 130048
      %443 = vst.msk [vmem:[%s271 + $0x8] sm:$0xff] %vm442, %v440
      %s444 = smul.u32 2, %s20
      %p445 = scmp.lt.s32.totalorder %s19, 1
      %s446 = scalar_select %p445, %s19, 1
      %p447 = scmp.lt.s32.totalorder %s444, 1
      %s448 = scalar_select %p447, %s444, 1
      %s449 = smul.addr %s446, 2
      %s450 = sadd.s32 %s448, %s449
      %s451 = smul.addr %s450, 8
      %s452 = scalar_lea.vmem %s4, %s451
      // Predicated region
      $region37: #{sn_fourier_unit.1} parent=35 // pred_check
        %p453 = pneg %p145
      $region38: #{sn_fourier_unit.1} parent=35 // pred_check_branch
        %455 = sbr.rel (%p453) target = $region40
      $region39: #{sn_fourier_unit.1} parent=35 // pred_region
        %s456 = smul.u32 2, %s20
      $region40: #{sn_fourier_unit.1} parent=35 // pred_fallthru
        _
    $region36: #{sn_fourier_unit.1} parent=5 // pred_fallthru
      _
    %p457 = scmp.le.s32.totalorder 2, %s10
    // Predicated region
    $region41: #{sn_fourier_unit.1} parent=5 // pred_check
      %p458 = pneg %p457
    $region42: #{sn_fourier_unit.1} parent=5 // pred_check_branch
      %460 = sbr.rel (%p458) target = $region44
    $region43: #{sn_fourier_unit.1} parent=5 // pred_region
      %s461 = ssub.s32 %s10, 2
      // Predicated region
      $region45: #{sn_fourier_unit.1} parent=43 // pred_check
        %p462 = pneg %p151
      $region46: #{sn_fourier_unit.1} parent=43 // pred_check_branch
        %464 = sbr.rel (%p462) target = $region48
      $region47: #{sn_fourier_unit.1} parent=43 // pred_region
        %s465 = smul.u32 2, %s22
        %p466 = scmp.lt.s32.totalorder %s21, 1
        %s467 = scalar_select %p466, %s21, 1
        %p468 = scmp.lt.s32.totalorder %s465, 1
        %s469 = scalar_select %p468, %s465, 1
        %s470 = smul.addr %s467, 2
        %s471 = sadd.s32 %s469, %s470
        %s472 = smul.addr %s471, 8
        %s473 = scalar_lea.vmem %s4, %s472
      $region48: #{sn_fourier_unit.1} parent=43 // pred_fallthru
        _
    $region44: #{sn_fourier_unit.1} parent=5 // pred_fallthru
      _
  $region6: #{sn_fourier_unit.1} parent=0 // loop_footer
    %s14 = sadd.s32 1, %s10
  $region7: #{sn_fourier_unit.1} parent=0 // loop_footer_branch
    %9 = sbr.rel target = $region3
  $region8: #{sn_fourier_unit.1} parent=0 // loop_exit
    _

</llo_original>
